<compile_context>
chip_gen: v7x
topology: tpu7x:2x2x1
jax: 0.10.0
libtpu: 0.0.40
codegen_flags: <defaults>
</compile_context>

<pallas_src>
import functools
import math

import numpy as np
import jax
import jax.numpy as jnp
from jax.experimental import pallas as pl
from jax.experimental.pallas import tpu as pltpu

_LANES = 128


def _msle_partial_kernel(pred_ref, target_ref, out_ref, *, acc_rows):
    """Accumulate per-slot sums of (log(1+p) - log(1+t))^2 into out_ref.

    pred_ref / target_ref : (tile_rows, 128) lane-dense input tiles.
    out_ref               : (acc_rows, 128) f32 partial sums, resident in VMEM
                            across the serial reduction axis (block index does
                            not change with `i`).
    """
    i = pl.program_id(1)           # serial reduction axis over batch tiles

    @pl.when(i == 0)
    def _():
        out_ref[...] = jnp.zeros_like(out_ref)

    # Elementwise MSLE term on the lane-dense tile; all math in f32.
    p = jnp.maximum(pred_ref[...].astype(jnp.float32), 0.0)
    t = jnp.maximum(target_ref[...].astype(jnp.float32), 0.0)
    d = jnp.log(1.0 + p) - jnp.log(1.0 + t)    # == log1p for p, t >= 0 (fp32)
    l = d * d

    # Layout-preserving sublane-group reduction: acc_rows is a multiple of 8,
    # so each (acc_rows, 128) slab is a whole number of vregs -> pure VPU adds.
    tile_rows = l.shape[0]
    out_ref[...] += jnp.sum(
        l.reshape(tile_rows // acc_rows, acc_rows, _LANES), axis=0)


def msle_loss(pred, target, *, max_tile_rows=2048, num_splits=1):
    """Pallas MSLE loss for (N, C) pred/target with C >= 3 (any N, any dtype)."""
    N, C = pred.shape
    assert target.shape == (N, C)
    assert C >= 3, "MSLELoss needs columns 0..2 (density, dyn. viscosity, surfT)"

    total = N * C
    flat_p = jnp.reshape(pred, (-1,))          # free (contiguous row-major)
    flat_t = jnp.reshape(target, (-1,))

    # Smallest multiple of 8 rows such that the column ((row*128 + lane) % C)
    # of every accumulator slot is independent of the grid step.
    acc_rows = 8 * C // math.gcd(C, 8 * _LANES)

    rows_all = total // _LANES                 # full 128-lane rows available
    rows_per_split = rows_all // num_splits

    if rows_per_split >= acc_rows:
        cap = max(acc_rows, (max_tile_rows // acc_rows) * acc_rows)
        tile_rows = min(cap, (rows_per_split // acc_rows) * acc_rows)
        steps = rows_per_split // tile_rows
        main_rows = num_splits * steps * tile_rows
    else:
        tile_rows, steps, main_rows = 0, 0, 0  # tiny input: pure jnp path
    main_elems = main_rows * _LANES            # always a multiple of C

    main_sum = jnp.float32(0.0)
    if main_rows > 0:
        if total % _LANES == 0:
            # Free bitcast view; the kernel only reads its first main_rows rows.
            p2d = flat_p.reshape(rows_all, _LANES)
            t2d = flat_t.reshape(rows_all, _LANES)
        else:
            # Ragged total: slice the 128-aligned prefix (may cost a copy;
            # prefer N*C % 128 == 0 when this loss is on the critical path).
            p2d = flat_p[:main_elems].reshape(main_rows, _LANES)
            t2d = flat_t[:main_elems].reshape(main_rows, _LANES)

        kernel = functools.partial(_msle_partial_kernel, acc_rows=acc_rows)
        in_spec = pl.BlockSpec((tile_rows, _LANES),
                               lambda s, i: (s * steps + i, 0))
        out_spec = pl.BlockSpec((acc_rows, _LANES), lambda s, i: (s, 0))

        partials = pl.pallas_call(
            kernel,
            out_shape=jax.ShapeDtypeStruct((num_splits * acc_rows, _LANES),
                                           jnp.float32),
            grid_spec=pltpu.PrefetchScalarGridSpec(
                num_scalar_prefetch=0,
                grid=(num_splits, steps),
                in_specs=[in_spec, in_spec],
                out_specs=out_spec,
            ),
            compiler_params=pltpu.CompilerParams(
                # split axis shards across TensorCores (v7x); batch-tile axis
                # is a serial reduction into the resident output block.
                dimension_semantics=("parallel", "arbitrary"),
            ),
        )(p2d, t2d)

        # One-time column selection on the tiny partial grid (host constants).
        pos = (np.arange(acc_rows)[:, None] * _LANES
               + np.arange(_LANES)[None, :]) % C
        col_mask = jnp.asarray((pos < 3).astype(np.float32))
        main_sum = jnp.sum(
            partials.reshape(num_splits, acc_rows, _LANES) * col_mask)

    # Ragged tail (< num_splits * tile_rows * 128 + 128 elements) in plain XLA.
    tail_len = total - main_elems
    tail_sum = jnp.float32(0.0)
    if tail_len > 0:
        tp = jnp.maximum(flat_p[main_elems:].astype(jnp.float32), 0.0)
        tt = jnp.maximum(flat_t[main_elems:].astype(jnp.float32), 0.0)
        d = jnp.log1p(tp) - jnp.log1p(tt)
        cols = jnp.asarray((np.arange(tail_len) % C) < 3)
        tail_sum = jnp.sum(jnp.where(cols, d * d, jnp.float32(0.0)))

    # loss[:,0].mean() + loss[:,1].mean() + loss[:,2].mean()
    #   == (sum of squared log-diffs over columns 0..2) / N
    return (main_sum + tail_sum) / jnp.float32(N)


def msle_loss_ref(pred, target):
    p = jnp.maximum(pred.astype(jnp.float32), 0.0)
    t = jnp.maximum(target.astype(jnp.float32), 0.0)
    loss = (jnp.log1p(p) - jnp.log1p(t)) ** 2
    return loss[:, 0].mean() + loss[:, 1].mean() + loss[:, 2].mean()


def _check(pred, target, **kw):
    out = jax.block_until_ready(msle_loss(pred, target, **kw))
    ref = jax.block_until_ready(msle_loss_ref(pred, target))
    assert jnp.allclose(out, ref, rtol=1e-4, atol=1e-5), (kw, out, ref)


if __name__ == "__main__":
    key = jax.random.PRNGKey(0)
    k1, k2, k3, k4, k5, k6 = jax.random.split(key, 6)

    # Main case: batch of 512 samples, 4 predicted quantities (first 3 used).
    # N*C = 2048 -> free reshape, no tail; single-tile kernel run.
    N, C = 512, 4
    pred = jax.random.normal(k1, (N, C), dtype=jnp.float32) * 2.0 + 0.5
    target = jax.random.normal(k2, (N, C), dtype=jnp.float32) * 2.0 + 0.5
    _check(pred, target)

    # Multi-step reduction + 2-way split (v7x-style grid; serial loop on 1-TC).
    pred2 = jax.random.normal(k3, (4096, 4), dtype=jnp.float32)
    target2 = jax.random.normal(k4, (4096, 4), dtype=jnp.float32)
    _check(pred2, target2, max_tile_rows=16, num_splits=2)

    # Ragged size (N*C not a multiple of 128) and non-power-of-two C:
    # exercises the prefix-slice fallback, the jnp tail, and acc_rows=40.
    pred3 = jax.random.normal(k5, (2000, 5), dtype=jnp.float32)
    target3 = jax.random.normal(k6, (2000, 5), dtype=jnp.float32)
    _check(pred3, target3)

    # bf16 inputs (no wrapper upcast; math still f32 inside the kernel).
    _check(pred.astype(jnp.bfloat16), target.astype(jnp.bfloat16))

    print("KERNEL_OK")
</pallas_src>

<mosaic_0001>
module attributes {stable_mosaic.version = 11 : i64} {
  func.func @_msle_partial_kernel(%arg0: i32, %arg1: i32, %arg2: memref<16x128xf32, #tpu.memory_space<vmem>>, %arg3: memref<16x128xf32, #tpu.memory_space<vmem>>, %arg4: memref<8x128xf32, #tpu.memory_space<vmem>>) attributes {dimension_semantics = [#tpu.dimension_semantics<parallel>, #tpu.dimension_semantics<arbitrary>], iteration_bounds = array<i64: 1, 1>, scalar_prefetch = 0 : i64, scratch_operands = 0 : i64, tpu.core_type = #tpu.core_type<tc>, window_params = [{transform_indices = @transform_0, window_bounds = array<i64: 16, 128>}, {transform_indices = @transform_1, window_bounds = array<i64: 16, 128>}, {transform_indices = @transform_2, window_bounds = array<i64: 8, 128>}]} {
    %c0_i32 = arith.constant 0 : i32
    %0 = arith.cmpi eq, %arg1, %c0_i32 : i32
    %1 = arith.extui %0 : i1 to i32
    %c0_i32_0 = arith.constant 0 : i32
    %2 = arith.cmpi ne, %1, %c0_i32_0 : i32
    scf.if %2 {
      %cst_12 = arith.constant 0.000000e+00 : f32
      %22 = vector.broadcast %cst_12 : f32 to vector<8x128xf32>
      %c0_13 = arith.constant 0 : index
      %c0_14 = arith.constant 0 : index
      %23 = vector.load %arg4[%c0_13, %c0_14] : memref<8x128xf32, #tpu.memory_space<vmem>>, vector<8x128xf32>
      tpu.vector_store %arg4[%c0_13, %c0_14], %22 {strides = array<i32>} : memref<8x128xf32, #tpu.memory_space<vmem>>, vector<8x128xf32>,
    } else {
    }
    %c0 = arith.constant 0 : index
    %c0_1 = arith.constant 0 : index
    %3 = vector.load %arg2[%c0, %c0_1] : memref<16x128xf32, #tpu.memory_space<vmem>>, vector<16x128xf32>
    %cst = arith.constant 0.000000e+00 : f32
    %4 = vector.broadcast %cst : f32 to vector<16x128xf32>
    %5 = arith.maximumf %3, %4 : vector<16x128xf32>
    %c0_2 = arith.constant 0 : index
    %c0_3 = arith.constant 0 : index
    %6 = vector.load %arg3[%c0_2, %c0_3] : memref<16x128xf32, #tpu.memory_space<vmem>>, vector<16x128xf32>
    %cst_4 = arith.constant 0.000000e+00 : f32
    %7 = vector.broadcast %cst_4 : f32 to vector<16x128xf32>
    %8 = arith.maximumf %6, %7 : vector<16x128xf32>
    %cst_5 = arith.constant 1.000000e+00 : f32
    %9 = vector.broadcast %cst_5 : f32 to vector<16x128xf32>
    %10 = arith.addf %9, %5 : vector<16x128xf32>
    %11 = math.log %10 : vector<16x128xf32>
    %cst_6 = arith.constant 1.000000e+00 : f32
    %12 = vector.broadcast %cst_6 : f32 to vector<16x128xf32>
    %13 = arith.addf %12, %8 : vector<16x128xf32>
    %14 = math.log %13 : vector<16x128xf32>
    %15 = arith.subf %11, %14 : vector<16x128xf32>
    %16 = arith.mulf %15, %15 : vector<16x128xf32>
    %c0_7 = arith.constant 0 : index
    %c0_8 = arith.constant 0 : index
    %17 = vector.load %arg4[%c0_7, %c0_8] : memref<8x128xf32, #tpu.memory_space<vmem>>, vector<8x128xf32>
    %18 = vector.shape_cast %16 : vector<16x128xf32> to vector<2x8x128xf32>
    %cst_9 = arith.constant dense<0.000000e+00> : vector<8x128xf32>
    %19 = vector.multi_reduction <add>, %18, %cst_9 [0] : vector<2x8x128xf32> to vector<8x128xf32>
    %20 = arith.addf %17, %19 : vector<8x128xf32>
    %c0_10 = arith.constant 0 : index
    %c0_11 = arith.constant 0 : index
    %21 = vector.load %arg4[%c0_10, %c0_11] : memref<8x128xf32, #tpu.memory_space<vmem>>, vector<8x128xf32>
    tpu.vector_store %arg4[%c0_10, %c0_11], %20 {strides = array<i32>} : memref<8x128xf32, #tpu.memory_space<vmem>>, vector<8x128xf32>,
    return
  }
  func.func @transform_0(%arg0: i32, %arg1: i32) -> (i32, i32) {
    %c1_i32 = arith.constant 1 : i32
    %0 = arith.muli %arg0, %c1_i32 : i32
    %1 = arith.addi %0, %arg1 : i32
    %c0_i32 = arith.constant 0 : i32
    %c0_i32_0 = arith.constant 0 : i32
    return %1, %c0_i32 : i32, i32
  }
  func.func @transform_1(%arg0: i32, %arg1: i32) -> (i32, i32) {
    %c1_i32 = arith.constant 1 : i32
    %0 = arith.muli %arg0, %c1_i32 : i32
    %1 = arith.addi %0, %arg1 : i32
    %c0_i32 = arith.constant 0 : i32
    %c0_i32_0 = arith.constant 0 : i32
    return %1, %c0_i32 : i32, i32
  }
  func.func @transform_2(%arg0: i32, %arg1: i32) -> (i32, i32) {
    %c0_i32 = arith.constant 0 : i32
    %c0_i32_0 = arith.constant 0 : i32
    return %arg0, %c0_i32 : i32, i32
  }
}

</mosaic_0001>

<llo_original>
// kernel: tpu_custom_call.1
$region0: #{tpu_custom_call.1}
  #allocation0 [shape = 'u32[]', space=smem, size = 0x4, offset = 0x4, fixed_abs, tag = 'smem constant byte address 0x4 - core index']
  #allocation1 [shape = 'u32[144,128]{1,0:T(1,128)}', space=vmem, size = 0x12000, scoped, tag = 'internal scratch']
  %s0 = inlined_call_operand.hbm [shape: f32[16,128], index: 0, kind: input, shape index: {}]
  %s1 = inlined_call_operand.hbm [shape: f32[16,128], index: 1, kind: input, shape index: {}]
  %s2 = inlined_call_operand.hbm [shape: f32[8,128], index: 2, kind: output, shape index: {}]
  %s3 = sld [smem:[#allocation0]]
  $region30: #{tpu_custom_call.1} parent=0
    _
  %s5 = ssub.s32 1, %s3
  %s6 = scalar_select 0, %s5, %s3
  $region1: #{tpu_custom_call.1} parent=0
    #allocation2 [shape = 'u8[8192]{0}', space=vmem, size = 0x2000, scoped, tag = 'input window, operand 0, single buffered']
    #allocation3 [shape = 's32[1]{0}', space=sflag, size = 0x4, scoped, tag = 'scoped memory for tpu_custom_call.1']
    #allocation4 [shape = 's32[1]{0}', space=sflag, size = 0x4, scoped, tag = 'scoped memory for tpu_custom_call.1']
    #allocation5 [shape = 'u8[8192]{0}', space=vmem, size = 0x2000, scoped, tag = 'input window, operand 1, single buffered']
    #allocation6 [shape = 's32[1]{0}', space=sflag, size = 0x4, scoped, tag = 'scoped memory for tpu_custom_call.1']
    #allocation7 [shape = 'u8[4096]{0}', space=vmem, size = 0x1000, scoped, tag = 'output window, operand 0, single buffered']
    %7 = vsyncpa [#allocation3], 0
    %8 = vsyncpa [#allocation6], 0
    %9 = vsyncpa [#allocation4], 0
    // Predicated region
    $region2: #{tpu_custom_call.1} parent=1 // pred_check
      _
    $region3: #{tpu_custom_call.1} parent=1 // pred_check_branch
      %11 = sbr.rel (0) target = $region5
    $region4: #{tpu_custom_call.1} parent=1 // pred_region
      %s12 = sadd.s32 0, 0
      %s13 = smul.u32 2, %s12
      %s15 = ssub.s32 256, 256
      %16 = vsyncadd [#allocation3], %s15
      %s17 = smul.addr %s13, 128
      %s18 = scalar_lea.hbm %s0, %s17
      %s19 = sshll.u32 [#allocation2], 4
      %s20 = int_to_ptr.vmem [resolvable:$true] %s19
      %25 = dma.hbm_to_vmem [thread:$0]  %s18, 256, %s20, [#allocation3], 128, 128, 8
    $region5: #{tpu_custom_call.1} parent=1 // pred_fallthru
      _
    // Predicated region
    $region6: #{tpu_custom_call.1} parent=1 // pred_check
      _
    $region7: #{tpu_custom_call.1} parent=1 // pred_check_branch
      %27 = sbr.rel (0) target = $region9
    $region8: #{tpu_custom_call.1} parent=1 // pred_region
      %s28 = sadd.s32 0, 0
      %s29 = smul.u32 2, %s28
      %s31 = ssub.s32 256, 256
      %32 = vsyncadd [#allocation6], %s31
      %s33 = smul.addr %s29, 128
      %s34 = scalar_lea.hbm %s1, %s33
      %s35 = sshll.u32 [#allocation5], 4
      %s36 = int_to_ptr.vmem [resolvable:$true] %s35
      %41 = dma.hbm_to_vmem [thread:$0]  %s34, 256, %s36, [#allocation6], 128, 128, 8
    $region9: #{tpu_custom_call.1} parent=1 // pred_fallthru
      _
    // Predicated region
    $region10: #{tpu_custom_call.1} parent=1 // pred_check
      _
    $region11: #{tpu_custom_call.1} parent=1 // pred_check_branch
      %43 = sbr.rel (0) target = $region13
    $region12: #{tpu_custom_call.1} parent=1 // pred_region
      %44 = dma.done [#allocation3], 256
    $region13: #{tpu_custom_call.1} parent=1 // pred_fallthru
      _
    // Predicated region
    $region14: #{tpu_custom_call.1} parent=1 // pred_check
      _
    $region15: #{tpu_custom_call.1} parent=1 // pred_check_branch
      %46 = sbr.rel (0) target = $region17
    $region16: #{tpu_custom_call.1} parent=1 // pred_region
      %47 = dma.done [#allocation6], 256
    $region17: #{tpu_custom_call.1} parent=1 // pred_fallthru
      _
    %s48 = sadd.s32 0, 0
    %s49 = smul.u32 2, %s48
    %s50 = sadd.s32 0, 0
    %s51 = smul.u32 2, %s50
    %p52 = scmp.eq.s32.totalorder 0, 0
    // Predicated region
    $region18: #{tpu_custom_call.1} parent=1 // pred_check
      %p53 = pneg %p52
    $region19: #{tpu_custom_call.1} parent=1 // pred_check_branch
      %55 = sbr.rel (%p53) target = $region21
    $region20: #{tpu_custom_call.1} parent=1 // pred_region
      %56 = vst [vmem:[#allocation7] sm:$0xff] 0.0
    $region21: #{tpu_custom_call.1} parent=1 // pred_fallthru
      _
    %v57 = vld [vmem:[#allocation2] sm:$0xff]
    %v58 = vld [vmem:[#allocation2 + $0x8] sm:$0xff]
    %v59 = vmax.f32 %v57, 0.0
    %v60 = vmax.f32 %v58, 0.0
    %v61 = vld [vmem:[#allocation5] sm:$0xff]
    %v62 = vld [vmem:[#allocation5 + $0x8] sm:$0xff]
    %v63 = vmax.f32 %v61, 0.0
    %v64 = vmax.f32 %v62, 0.0
    %v65 = vadd.f32 %v59, 1.0
    %v66 = vadd.f32 %v60, 1.0
    %v67 = vlog2.pop %v65
    %v68 = vmul.f32 %v67, 0.6931472
    %v69 = vlog2.pop %v66
    %v70 = vmul.f32 %v69, 0.6931472
    %v71 = vadd.f32 %v63, 1.0
    %v72 = vadd.f32 %v64, 1.0
    %v73 = vlog2.pop %v71
    %v74 = vmul.f32 %v73, 0.6931472
    %v75 = vlog2.pop %v72
    %v76 = vmul.f32 %v75, 0.6931472
    %v77 = vsub.f32 %v68, %v74
    %v78 = vsub.f32 %v70, %v76
    %v79 = vmul.f32 %v77, %v77
    %v80 = vmul.f32 %v78, %v78
    %v81 = vld [vmem:[#allocation7] sm:$0xff]
    %v82 = vadd.f32 %v79, %v80
    %v83 = vadd.f32 %v81, %v82
    %84 = vst [vmem:[#allocation7] sm:$0xff] %v83
    // Predicated region
    $region22: #{tpu_custom_call.1} parent=1 // pred_check
      _
    $region23: #{tpu_custom_call.1} parent=1 // pred_check_branch
      %86 = sbr.rel (0) target = $region25
    $region24: #{tpu_custom_call.1} parent=1 // pred_region
      %s88 = ssub.s32 128, 128
      %89 = vsyncadd [#allocation4], %s88
      %s91 = sshll.u32 [#allocation7], 4
      %s92 = int_to_ptr.vmem [resolvable:$true] %s91
      %94 = dma.vmem_to_hbm [thread:$0]  %s92, 128, %s2, [#allocation4]
    $region25: #{tpu_custom_call.1} parent=1 // pred_fallthru
      _
    // Predicated region
    $region26: #{tpu_custom_call.1} parent=1 // pred_check
      _
    $region27: #{tpu_custom_call.1} parent=1 // pred_check_branch
      %96 = sbr.rel (0) target = $region29
    $region28: #{tpu_custom_call.1} parent=1 // pred_region
      %97 = dma.done [#allocation4], 128
    $region29: #{tpu_custom_call.1} parent=1 // pred_fallthru
      _
    %98 = vsyncpa [#allocation3], 1
    %99 = vsyncpa [#allocation6], 1
    %100 = vsyncpa [#allocation4], 1

</llo_original>
